<compile_context>
chip_gen: v7x
topology: tpu7x:2x2x1
jax: 0.10.0
libtpu: 0.0.40
codegen_flags: <defaults>
</compile_context>

<pallas_src>
import functools

import jax
import jax.numpy as jnp
from jax import lax
from jax.experimental import pallas as pl
from jax.experimental.pallas import tpu as pltpu


_VMEM_BUDGET_BYTES = 26 * 1024 * 1024   # planned VMEM occupancy (headroom under the limit we request)
_FIXED_SLACK_BYTES = 2 * 1024 * 1024    # accumulator / output blocks / misc transients


def _head_kernel(*refs, inv_hw: float, do_whitening: bool):
    if do_whitening:
        x_ref, w_hbm, b_ref, o_ref, acc_ref, w_vmem, w_sem = refs
    else:
        x_ref, o_ref, acc_ref = refs
        w_hbm = b_ref = w_vmem = w_sem = None

    s = pl.program_id(1)                      # spatial-reduction grid step (innermost, "arbitrary")

    @pl.when(s == 0)
    def _():
        acc_ref[...] = jnp.zeros_like(acc_ref)
        if do_whitening:
            # Single-buffered weight copy HBM->VMEM.  Issued once per batch
            # tile (so it stays correct under a megacore split of the batch
            # axis) and overlapped with the entire spatial stream of the tile.
            pltpu.make_async_copy(w_hbm, w_vmem, w_sem).start()

    # Partial spatial sum of this [tb, C, thw] chunk; thw sits on the 128-lane
    # axis so the reduce uses the XLU slot, accumulated in f32.
    acc_ref[...] += jnp.sum(x_ref[...], axis=-1, dtype=jnp.float32)

    @pl.when(s == pl.num_programs(1) - 1)
    def _():
        pooled = acc_ref[...] * inv_hw                      # [tb, C] global average pool (f32)
        if do_whitening:
            pltpu.make_async_copy(w_hbm, w_vmem, w_sem).wait()
            # pooled @ W^T without transposing the [D, C] weight; weight stays
            # in its native dtype (bf16 MXU fast path), f32 accumulation.
            desc = lax.dot_general(
                pooled.astype(w_vmem.dtype), w_vmem[...],
                dimension_numbers=(((1,), (1,)), ((), ())),
                preferred_element_type=jnp.float32)         # [tb, D]
            desc = desc + b_ref[...].astype(jnp.float32)
        else:
            desc = pooled                                   # [tb, C]
        # L2 normalization: x / max(||x||, 1e-12) == x * rsqrt(max(||x||^2, 1e-24)).
        ss = jnp.sum(desc * desc, axis=-1, keepdims=True)
        o_ref[...] = (desc * lax.rsqrt(jnp.maximum(ss, 1e-24))).astype(o_ref.dtype)


def _largest_divisor(n: int, cap: int, align: int):
    """Largest d with d | n, d <= cap and d % align == 0; None if there is none."""
    d = (min(cap, n) // align) * align
    while d >= align:
        if n % d == 0:
            return d
        d -= align
    return None


def base_head_forward(x_nchw, weight=None, bias=None, do_whitening=True,
                      *, tb=None, thw=None):
    """x_nchw: [B, C, H, W]; weight: [out_dim, inp_dim] (PyTorch layout); bias: [out_dim]."""
    B, C, H, W = x_nchw.shape
    HW = H * W
    x_3d = x_nchw.reshape(B, C, HW)                  # free: merges the two minor dims, keeps NCHW
    x_item = jnp.dtype(x_nchw.dtype).itemsize

    if do_whitening:
        assert weight is not None and bias is not None
        D, c_w = weight.shape
        assert c_w == C, "whitening weight must be [out_dim, inp_dim] with inp_dim == C"
        w_bytes = D * C * jnp.dtype(weight.dtype).itemsize   # single VMEM copy (not double-buffered)
        b_bytes = 2 * D * jnp.dtype(bias.dtype).itemsize     # tiny, auto-pipelined
    else:
        D = C
        w_bytes = b_bytes = 0

    # --- x tile budget (in elements): double-buffered tile + (sub-f32 only) f32 reduce transient ---
    per_elem = 2 * x_item + (4 if x_item < 4 else 0)
    x_elems_budget = (_VMEM_BUDGET_BYTES - w_bytes - b_bytes - _FIXED_SLACK_BYTES) // per_elem

    min_tb = 8 if (B >= 8 and B % 8 == 0) else B     # output-block rule: tb % 8 == 0 or tb == B

    if thw is None:
        cap = max(x_elems_budget // (min_tb * C), 128)
        thw = _largest_divisor(HW, cap, 128) or HW   # lane dim: multiple of 128, or full HW
        # TODO(synk): very large HW with no 128-multiple divisor would want spatial
        # padding or C-blocking; the full-HW fallback is used here.
    if tb is None:
        cap = max(x_elems_budget // (thw * C), 1)
        tb = _largest_divisor(B, cap, 8) or min_tb
        if B // tb < 2:                              # give the 2nd v7x TensorCore work when possible
            tb_half = _largest_divisor(B, B // 2, 8)
            if tb_half is not None:
                tb = min(tb, tb_half)
    assert B % tb == 0 and HW % thw == 0, "tile sizes must divide the array dims"
    assert (tb % 8 == 0 or tb == B) and (thw % 128 == 0 or thw == HW)
    grid = (B // tb, HW // thw)

    # --- explicit VMEM accounting -> scoped-VMEM request (covers v5e's 16 MiB default) ---
    x_tile = tb * C * thw
    need = (2 * x_tile * x_item + (4 * x_tile if x_item < 4 else 0)   # x double-buffer (+ f32 transient)
            + w_bytes + b_bytes                                       # params
            + tb * C * 4                                              # f32 accumulator
            + 2 * tb * D * x_item)                                    # output double-buffer
    vmem_limit = min(max(32 << 20, int(need * 1.2) + (2 << 20)), 100 << 20)

    in_specs = [pl.BlockSpec((tb, C, thw), lambda i, s: (i, 0, s))]
    inputs = [x_3d]
    scratch = [pltpu.VMEM((tb, C), jnp.float32)]
    if do_whitening:
        in_specs += [
            pl.BlockSpec(memory_space=pl.ANY),               # weight [D, C]: raw HBM, manual DMA
            pl.BlockSpec((1, D), lambda i, s: (0, 0)),       # bias (tiny)
        ]
        inputs += [weight, bias.reshape(1, D)]
        scratch += [pltpu.VMEM((D, C), weight.dtype),        # single-buffered weight copy
                    pltpu.SemaphoreType.DMA(())]

    kernel = functools.partial(_head_kernel, inv_hw=1.0 / HW, do_whitening=do_whitening)

    return pl.pallas_call(
        kernel,
        out_shape=jax.ShapeDtypeStruct((B, D), x_nchw.dtype),
        grid_spec=pltpu.PrefetchScalarGridSpec(
            num_scalar_prefetch=0,
            grid=grid,
            in_specs=in_specs,
            out_specs=pl.BlockSpec((tb, D), lambda i, s: (i, 0)),
            scratch_shapes=scratch,
        ),
        compiler_params=pltpu.CompilerParams(
            dimension_semantics=("parallel", "arbitrary"),
            vmem_limit_bytes=vmem_limit),
    )(*inputs)


def _reference(x_nchw, weight, bias, do_whitening=True):
    pooled = jnp.mean(x_nchw.astype(jnp.float32), axis=(2, 3))        # [B, C]
    if do_whitening:
        desc = pooled @ weight.astype(jnp.float32).T + bias.astype(jnp.float32)
    else:
        desc = pooled
    return desc / jnp.maximum(jnp.linalg.norm(desc, axis=-1, keepdims=True), 1e-12)


if __name__ == "__main__":
    # Small shapes consistent with the module: inp_dim = C.
    B, C, H, W = 2, 32, 16, 16
    inp_dim, out_dim = C, 32

    key = jax.random.PRNGKey(0)
    kx, kw = jax.random.split(key)

    x = jax.random.normal(kx, (B, C, H, W), dtype=jnp.float32)

    # Deterministic parameter init mirroring reset_parameters():
    #   nn.init.xavier_normal_(weight, gain=1.0), bias = 0.
    std = (2.0 / (inp_dim + out_dim)) ** 0.5
    weight = std * jax.random.normal(kw, (out_dim, inp_dim), dtype=jnp.float32)
    bias = jnp.zeros((out_dim,), dtype=jnp.float32)

    ref_w = _reference(x, weight, bias, do_whitening=True)
    ref_p = _reference(x, weight, bias, do_whitening=False)

    # 1) whitening, automatic tiling (single grid step).
    out1 = jax.block_until_ready(base_head_forward(x, weight, bias, do_whitening=True))
    assert out1.shape == (B, out_dim)
    assert jnp.allclose(out1, ref_w, atol=1e-5, rtol=1e-5)

    # 2) whitening, forced 2-step spatial reduction (accumulator init/finalize
    #    + cross-grid-step weight DMA overlap).
    out2 = jax.block_until_ready(
        base_head_forward(x, weight, bias, do_whitening=True, thw=128))
    assert jnp.allclose(out2, ref_w, atol=1e-5, rtol=1e-5)

    # 3) no whitening: weight/bias never passed or DMA'd.
    out3 = jax.block_until_ready(base_head_forward(x, do_whitening=False, thw=128))
    assert out3.shape == (B, C)
    assert jnp.allclose(out3, ref_p, atol=1e-5, rtol=1e-5)

    # 4) multi-batch-tile grid (B=16 -> tb=8, 2 "parallel" steps) and the
    #    full-HW lane fallback (HW=64 < 128); repeated per-tile weight DMA.
    B2, H2, W2 = 16, 8, 8
    x2 = jax.random.normal(kx, (B2, C, H2, W2), dtype=jnp.float32)
    ref2 = _reference(x2, weight, bias, do_whitening=True)
    out4 = jax.block_until_ready(base_head_forward(x2, weight, bias, do_whitening=True))
    assert out4.shape == (B2, out_dim)
    assert jnp.allclose(out4, ref2, atol=1e-5, rtol=1e-5)

    # 5) bf16 activations/params compile & run (f32 accumulation in-kernel,
    #    native-dtype bf16 MXU matmul).
    out5 = jax.block_until_ready(
        base_head_forward(x.astype(jnp.bfloat16), weight.astype(jnp.bfloat16),
                          bias.astype(jnp.bfloat16), do_whitening=True, thw=128))
    assert out5.shape == (B, out_dim)
    assert bool(jnp.all(jnp.isfinite(out5.astype(jnp.float32))))

    print("KERNEL_OK")
</pallas_src>

<mosaic_0001>
module attributes {stable_mosaic.version = 11 : i64} {
  func.func @_head_kernel(%arg0: i32, %arg1: i32, %arg2: memref<2x32x256xf32, #tpu.memory_space<vmem>>, %arg3: memref<32x32xf32, #tpu.memory_space<any>>, %arg4: memref<1x32xf32, #tpu.memory_space<vmem>>, %arg5: memref<2x32xf32, #tpu.memory_space<vmem>>, %arg6: memref<2x32xf32, #tpu.memory_space<vmem>>, %arg7: memref<32x32xf32, #tpu.memory_space<vmem>>, %arg8: memref<!tpu.dma_semaphore, #tpu.memory_space<semaphore_mem>>) attributes {dimension_semantics = [#tpu.dimension_semantics<parallel>, #tpu.dimension_semantics<arbitrary>], iteration_bounds = array<i64: 1, 1>, scalar_prefetch = 0 : i64, scratch_operands = 3 : i64, tpu.core_type = #tpu.core_type<tc>, window_params = [{transform_indices = @transform_0, window_bounds = array<i64: 2, 32, 256>}, {}, {pipeline_mode = #tpu.pipeline_mode<synchronous>, transform_indices = @transform_2, window_bounds = array<i64: 1, 32>}, {transform_indices = @transform_3, window_bounds = array<i64: 2, 32>}]} {
    %c0_i32 = arith.constant 0 : i32
    %0 = arith.cmpi eq, %arg1, %c0_i32 : i32
    %1 = arith.extui %0 : i1 to i32
    %c0_i32_0 = arith.constant 0 : i32
    %2 = arith.cmpi ne, %1, %c0_i32_0 : i32
    scf.if %2 {
      %cst_9 = arith.constant 0.000000e+00 : f32
      %11 = vector.broadcast %cst_9 : f32 to vector<2x32xf32>
      %c0_10 = arith.constant 0 : index
      %c0_11 = arith.constant 0 : index
      %12 = vector.load %arg6[%c0_10, %c0_11] : memref<2x32xf32, #tpu.memory_space<vmem>>, vector<2x32xf32>
      tpu.vector_store %arg6[%c0_10, %c0_11], %11 {strides = array<i32>} : memref<2x32xf32, #tpu.memory_space<vmem>>, vector<2x32xf32>,
      tpu.enqueue_dma source(%arg3 : memref<32x32xf32, #tpu.memory_space<any>>) target(%arg7 : memref<32x32xf32, #tpu.memory_space<vmem>>) target_semaphore(%arg8 : memref<!tpu.dma_semaphore, #tpu.memory_space<semaphore_mem>>)
    } else {
    }
    %c0 = arith.constant 0 : index
    %c0_1 = arith.constant 0 : index
    %3 = vector.load %arg6[%c0, %c0_1] : memref<2x32xf32, #tpu.memory_space<vmem>>, vector<2x32xf32>
    %c0_2 = arith.constant 0 : index
    %c0_3 = arith.constant 0 : index
    %c0_4 = arith.constant 0 : index
    %4 = vector.load %arg2[%c0_2, %c0_3, %c0_4] : memref<2x32x256xf32, #tpu.memory_space<vmem>>, vector<2x32x256xf32>
    %cst = arith.constant dense<0.000000e+00> : vector<2x32xf32>
    %5 = vector.multi_reduction <add>, %4, %cst [2] : vector<2x32x256xf32> to vector<2x32xf32>
    %6 = arith.addf %3, %5 : vector<2x32xf32>
    %c0_5 = arith.constant 0 : index
    %c0_6 = arith.constant 0 : index
    %7 = vector.load %arg6[%c0_5, %c0_6] : memref<2x32xf32, #tpu.memory_space<vmem>>, vector<2x32xf32>
    tpu.vector_store %arg6[%c0_5, %c0_6], %6 {strides = array<i32>} : memref<2x32xf32, #tpu.memory_space<vmem>>, vector<2x32xf32>,
    %c0_i32_7 = arith.constant 0 : i32
    %8 = arith.cmpi eq, %arg1, %c0_i32_7 : i32
    %9 = arith.extui %8 : i1 to i32
    %c0_i32_8 = arith.constant 0 : i32
    %10 = arith.cmpi ne, %9, %c0_i32_8 : i32
    scf.if %10 {
      %c0_9 = arith.constant 0 : index
      %c0_10 = arith.constant 0 : index
      %11 = vector.load %arg6[%c0_9, %c0_10] : memref<2x32xf32, #tpu.memory_space<vmem>>, vector<2x32xf32>
      %cst_11 = arith.constant 3.906250e-03 : f32
      %12 = vector.broadcast %cst_11 : f32 to vector<2x32xf32>
      %13 = arith.mulf %11, %12 : vector<2x32xf32>
      tpu.wait_dma2 semaphore(%arg8 : memref<!tpu.dma_semaphore, #tpu.memory_space<semaphore_mem>>) src(%arg3 : memref<32x32xf32, #tpu.memory_space<any>>) dst(%arg7 : memref<32x32xf32, #tpu.memory_space<vmem>>)
      %c0_12 = arith.constant 0 : index
      %c0_13 = arith.constant 0 : index
      %14 = vector.load %arg7[%c0_12, %c0_13] : memref<32x32xf32, #tpu.memory_space<vmem>>, vector<32x32xf32>
      %cst_14 = arith.constant dense<0.000000e+00> : vector<2x32xf32>
      %15 = tpu.matmul %13, %14, %cst_14 {dimension_numbers = #tpu.dot_dimension_numbers<[1], [1], [0], [0], [0, 0, 1, 0], [], []>} : vector<2x32xf32>, vector<32x32xf32>, vector<2x32xf32> -> vector<2x32xf32>
      %c0_15 = arith.constant 0 : index
      %c0_16 = arith.constant 0 : index
      %16 = vector.load %arg4[%c0_15, %c0_16] : memref<1x32xf32, #tpu.memory_space<vmem>>, vector<1x32xf32>
      %17 = vector.broadcast %16 : vector<1x32xf32> to vector<2x32xf32>
      %18 = arith.addf %15, %17 : vector<2x32xf32>
      %19 = arith.mulf %18, %18 : vector<2x32xf32>
      %cst_17 = arith.constant dense<0.000000e+00> : vector<2xf32>
      %20 = vector.multi_reduction <add>, %19, %cst_17 [1] : vector<2x32xf32> to vector<2xf32>
      %21 = vector.shape_cast %20 : vector<2xf32> to vector<2x1xf32>
      %cst_18 = arith.constant 1.000000e-24 : f32
      %22 = vector.broadcast %cst_18 : f32 to vector<2x1xf32>
      %23 = arith.maximumf %21, %22 : vector<2x1xf32>
      %24 = math.rsqrt %23 : vector<2x1xf32>
      %25 = vector.broadcast %24 : vector<2x1xf32> to vector<2x32xf32>
      %26 = arith.mulf %18, %25 : vector<2x32xf32>
      %c0_19 = arith.constant 0 : index
      %c0_20 = arith.constant 0 : index
      %27 = vector.load %arg5[%c0_19, %c0_20] : memref<2x32xf32, #tpu.memory_space<vmem>>, vector<2x32xf32>
      tpu.vector_store %arg5[%c0_19, %c0_20], %26 {strides = array<i32>} : memref<2x32xf32, #tpu.memory_space<vmem>>, vector<2x32xf32>,
    } else {
    }
    return
  }
  func.func @transform_0(%arg0: i32, %arg1: i32) -> (i32, i32, i32) {
    %c0_i32 = arith.constant 0 : i32
    %c0_i32_0 = arith.constant 0 : i32
    return %arg0, %c0_i32, %arg1 : i32, i32, i32
  }
  func.func @transform_2(%arg0: i32, %arg1: i32) -> (i32, i32) {
    %c0_i32 = arith.constant 0 : i32
    %c0_i32_0 = arith.constant 0 : i32
    %c0_i32_1 = arith.constant 0 : i32
    return %c0_i32, %c0_i32_0 : i32, i32
  }
  func.func @transform_3(%arg0: i32, %arg1: i32) -> (i32, i32) {
    %c0_i32 = arith.constant 0 : i32
    %c0_i32_0 = arith.constant 0 : i32
    return %arg0, %c0_i32 : i32, i32
  }
}

</mosaic_0001>

<llo_original>
// kernel: tpu_custom_call.1
$region0: #{tpu_custom_call.1}
  #allocation0 [shape = 'u32[]', space=smem, size = 0x4, offset = 0x4, fixed_abs, tag = 'smem constant byte address 0x4 - core index']
  #allocation1 [shape = 'u32[144,128]{1,0:T(1,128)}', space=vmem, size = 0x12000, scoped, tag = 'internal scratch']
  #allocation2 [shape = 'f32[2,32]{1,0:T(2,128)}', space=vmem, size = 0x400, scoped, tag = 'scratch operand']
  #allocation3 [shape = 'f32[32,32]{1,0:T(8,128)}', space=vmem, size = 0x4000, scoped, tag = 'scratch operand']
  #allocation4 [shape = 's32[1]{0}', space=sflag, size = 0x4, scoped, tag = 'scratch operand']
  #allocation9 [shape = 's32[]', space=sflag, size = 0x4, offset = 0, fixed_abs, tag = 'sflag constant byte address 0x0 - dummy sync flag']
  #allocation10 [shape = 's32[]', space=sflag, size = 0x4, offset = 0, fixed_abs, tag = 'sflag constant byte address 0x0 - dummy sync flag']
  #allocation11 [shape = 'u32[]', space=smem, size = 0x4, offset = 0x44, fixed_abs, tag = 'smem constant byte address 0x44 - assertion arg 0']
  #allocation12 [shape = 'u32[]', space=smem, size = 0x4, offset = 0x48, fixed_abs, tag = 'smem constant byte address 0x48 - assertion arg 1']
  %s0 = inlined_call_operand.hbm [shape: f32[2,32,256], index: 0, kind: input, shape index: {}]
  %s1 = inlined_call_operand.hbm [shape: f32[32,32], index: 1, kind: input, shape index: {}]
  %s2 = inlined_call_operand.vmem [shape: f32[1,32], index: 2, kind: input, shape index: {}]
  %s3 = inlined_call_operand.hbm [shape: f32[2,32], index: 3, kind: output, shape index: {}]
  %s4 = sld [smem:[#allocation0]]
  $region34: #{tpu_custom_call.1} parent=0
    _
  %s6 = ssub.s32 1, %s4
  %s7 = scalar_select 0, %s6, %s4
  $region1: #{tpu_custom_call.1} parent=0
    #allocation5 [shape = 'u8[65536]{0}', space=vmem, size = 0x10000, scoped, tag = 'input window, operand 0, single buffered']
    #allocation6 [shape = 's32[1]{0}', space=sflag, size = 0x4, scoped, tag = 'scoped memory for tpu_custom_call.1']
    #allocation7 [shape = 's32[1]{0}', space=sflag, size = 0x4, scoped, tag = 'scoped memory for tpu_custom_call.1']
    #allocation8 [shape = 'u8[1024]{0}', space=vmem, size = 0x400, scoped, tag = 'output window, operand 0, single buffered']
    %8 = vsyncpa [#allocation6], 0
    %9 = vsyncpa [#allocation7], 0
    // Predicated region
    $region2: #{tpu_custom_call.1} parent=1 // pred_check
      _
    $region3: #{tpu_custom_call.1} parent=1 // pred_check_branch
      %11 = sbr.rel (0) target = $region5
    $region4: #{tpu_custom_call.1} parent=1 // pred_region
      %s13 = ssub.s32 2048, 2048
      %14 = vsyncadd [#allocation6], %s13
      %s15 = sshll.u32 [#allocation5], 4
      %s16 = int_to_ptr.vmem [resolvable:$true] %s15
      %21 = dma.hbm_to_vmem [thread:$0]  %s0, 2048, %s16, [#allocation6], 256, 256, 16
    $region5: #{tpu_custom_call.1} parent=1 // pred_fallthru
      _
    // Predicated region
    $region6: #{tpu_custom_call.1} parent=1 // pred_check
      _
    $region7: #{tpu_custom_call.1} parent=1 // pred_check_branch
      %23 = sbr.rel (0) target = $region9
    $region8: #{tpu_custom_call.1} parent=1 // pred_region
      _
    $region9: #{tpu_custom_call.1} parent=1 // pred_fallthru
      _
    // Predicated region
    $region10: #{tpu_custom_call.1} parent=1 // pred_check
      _
    $region11: #{tpu_custom_call.1} parent=1 // pred_check_branch
      %25 = sbr.rel (0) target = $region13
    $region12: #{tpu_custom_call.1} parent=1 // pred_region
      %26 = dma.done [#allocation6], 2048
    $region13: #{tpu_custom_call.1} parent=1 // pred_fallthru
      _
    %p27 = scmp.eq.s32.totalorder 0, 0
    // Predicated region
    $region14: #{tpu_custom_call.1} parent=1 // pred_check
      %p28 = pneg %p27
    $region15: #{tpu_custom_call.1} parent=1 // pred_check_branch
      %30 = sbr.rel (%p28) target = $region17
    $region16: #{tpu_custom_call.1} parent=1 // pred_region
      %vm31 = vcmask 254976
      %32 = vst.msk [vmem:[#allocation2] sm:$0x3] %vm31, 0.0
      // Predicated region
      $region18: #{tpu_custom_call.1} parent=16 // pred_check
        _
      $region19: #{tpu_custom_call.1} parent=16 // pred_check_branch
        %34 = sbr.rel target = $region21
      $region20: #{tpu_custom_call.1} parent=16 // pred_region
        %35 = sst [smem:[#allocation11]] [#allocation10]
        %36 = sst [smem:[#allocation12]] [#allocation9]
      $region21: #{tpu_custom_call.1} parent=16 // pred_fallthru
        _
      %38 = shalt.err (0)
      %s40 = sshll.u32 [#allocation3], 4
      %s41 = int_to_ptr.vmem [resolvable:$true] %s40
      %43 = dma.hbm_to_vmem [thread:$0]  %s1, 512, %s41, [#allocation4]
    $region17: #{tpu_custom_call.1} parent=1 // pred_fallthru
      _
    %v44 = vld [vmem:[#allocation2] sm:$0x3]
    %v45 = vld [vmem:[#allocation5] sm:$0xff]
    %v46 = vld [vmem:[#allocation5 + $0x8] sm:$0xff]
    %v47 = vld [vmem:[#allocation5 + $0x10] sm:$0xff]
    %v48 = vld [vmem:[#allocation5 + $0x18] sm:$0xff]
    %v49 = vld [vmem:[#allocation5 + $0x20] sm:$0xff]
    %v50 = vld [vmem:[#allocation5 + $0x28] sm:$0xff]
    %v51 = vld [vmem:[#allocation5 + $0x30] sm:$0xff]
    %v52 = vld [vmem:[#allocation5 + $0x38] sm:$0xff]
    %v53 = vld [vmem:[#allocation5 + $0x40] sm:$0xff]
    %v54 = vld [vmem:[#allocation5 + $0x48] sm:$0xff]
    %v55 = vld [vmem:[#allocation5 + $0x50] sm:$0xff]
    %v56 = vld [vmem:[#allocation5 + $0x58] sm:$0xff]
    %v57 = vld [vmem:[#allocation5 + $0x60] sm:$0xff]
    %v58 = vld [vmem:[#allocation5 + $0x68] sm:$0xff]
    %v59 = vld [vmem:[#allocation5 + $0x70] sm:$0xff]
    %v60 = vld [vmem:[#allocation5 + $0x78] sm:$0xff]
    %v61 = vadd.f32 %v45, %v46
    %62 = vadd.xlane.f32.xlu0 %v61
    %v63 = vpop.xlane.xlu0 %62
    %v64 = vadd.f32 %v47, %v48
    %65 = vadd.xlane.f32.xlu0 %v64
    %v66 = vpop.xlane.xlu0 %65
    %v67 = vadd.f32 %v49, %v50
    %68 = vadd.xlane.f32.xlu0 %v67
    %v69 = vpop.xlane.xlu0 %68
    %v70 = vadd.f32 %v51, %v52
    %71 = vadd.xlane.f32.xlu0 %v70
    %v72 = vpop.xlane.xlu0 %71
    %v73 = vadd.f32 %v53, %v54
    %74 = vadd.xlane.f32.xlu0 %v73
    %v75 = vpop.xlane.xlu0 %74
    %v76 = vadd.f32 %v55, %v56
    %77 = vadd.xlane.f32.xlu0 %v76
    %v78 = vpop.xlane.xlu0 %77
    %v79 = vadd.f32 %v57, %v58
    %80 = vadd.xlane.f32.xlu0 %v79
    %v81 = vpop.xlane.xlu0 %80
    %v82 = vadd.f32 %v59, %v60
    %83 = vadd.xlane.f32.xlu0 %v82
    %v84 = vpop.xlane.xlu0 %83
    %v93 = vlaneseq
    %v94 = vand.u32 %v93, 127
    %v95 = vlaneseq
    %v96 = vshrl.u32 %v95, 7
    %v97 = vsub.s32 %v94, %v96
    %v98 = vrot.slane %v63, %v97
    %v99 = vadd.s32 %v94, 4294967288
    %v100 = vlaneseq
    %v101 = vshrl.u32 %v100, 7
    %v102 = vsub.s32 %v99, %v101
    %v103 = vrot.slane %v66, %v102
    %vm104 = vcmask 130112
    %v105 = vsel %vm104, %v103, %v98
    %v106 = vadd.s32 %v94, 4294967280
    %v107 = vlaneseq
    %v108 = vshrl.u32 %v107, 7
    %v109 = vsub.s32 %v106, %v108
    %v110 = vrot.slane %v69, %v109
    %vm111 = vcmask 195712
    %v112 = vsel %vm111, %v110, %v105
    %v113 = vadd.s32 %v94, 4294967272
    %v114 = vlaneseq
    %v115 = vshrl.u32 %v114, 7
    %v116 = vsub.s32 %v113, %v115
    %v117 = vrot.slane %v72, %v116
    %vm118 = vcmask 261312
    %v119 = vsel %vm118, %v117, %v112
    %v120 = vlaneseq
    %v121 = vshrl.u32 %v120, 7
    %v122 = vsub.s32 %v94, %v121
    %v123 = vrot.slane %v75, %v122
    %v124 = vlaneseq
    %v125 = vshrl.u32 %v124, 7
    %v126 = vsub.s32 %v99, %v125
    %v127 = vrot.slane %v78, %v126
    %v128 = vsel %vm104, %v127, %v123
    %v129 = vlaneseq
    %v130 = vshrl.u32 %v129, 7
    %v131 = vsub.s32 %v106, %v130
    %v132 = vrot.slane %v81, %v131
    %v133 = vsel %vm111, %v132, %v128
    %v134 = vlaneseq
    %v135 = vshrl.u32 %v134, 7
    %v136 = vsub.s32 %v113, %v135
    %v137 = vrot.slane %v84, %v136
    %v138 = vsel %vm118, %v137, %v133
    %vm139 = vcmask 1041409
    %v140 = vsel %vm139, %v138, %v119
    %v142 = vadd.f32 %v44, %v140
    %vm143 = vcmask 254976
    %144 = vst.msk [vmem:[#allocation2] sm:$0x3] %vm143, %v142
    // Predicated region
    $region22: #{tpu_custom_call.1} parent=1 // pred_check
      %p145 = pneg %p27
    $region23: #{tpu_custom_call.1} parent=1 // pred_check_branch
      %147 = sbr.rel (%p145) target = $region25
    $region24: #{tpu_custom_call.1} parent=1 // pred_region
      %v148 = vld [vmem:[#allocation2] sm:$0x3]
      %v149 = vmul.f32 %v148, 0.00390625
      %s150 = smul.u32 32, 1
      %s151 = sshll.u32 %s150, 4
      %152 = dma.done [#allocation4], %s151
      %v153 = vld [vmem:[#allocation3] sm:$0xff]
      %v154 = vld [vmem:[#allocation3 + $0x8] sm:$0xff]
      %v155 = vld [vmem:[#allocation3 + $0x10] sm:$0xff]
      %v156 = vld [vmem:[#allocation3 + $0x18] sm:$0xff]
      %v157 = vld [vmem:[%s2] sm:$0x1]
      %v159 = vlaneseq
      %v160 = vshrl.u32 %v159, 7
      %v161 = vsub.s32 0, %v160
      %v162 = vrot.slane %v157, %v161
      %vm164 = vcmask 261120
      %v166 = vsel %vm164, %v149, 0
      %v169 = vsel %vm164, %v153, 0
      %v172 = vsel %vm164, %v154, 0
      %v175 = vsel %vm164, %v155, 0
      %v178 = vsel %vm164, %v156, 0
      %180 = vmatprep.subr.mxu0 0.0
      %181 = vmatpush1.xpose.msra.mxu0 %v169
      %182 = vmatprep.subr.mxu0 0.0
      %183 = vmatpush1.xpose.msra.mxu0 %v172
      %184 = vmatprep.subr.mxu0 0.0
      %185 = vmatpush1.xpose.msra.mxu0 %v175
      %186 = vmatprep.subr.mxu0 0.0
      %187 = vmatpush1.xpose.msra.mxu0 %v178
      %188 = vmatprep.subr.mxu0 0.0
      %189 = vmatpush1.xpose.msra.mxu0 0.0
      %190 = vmatprep.subr.mxu0 0.0
      %191 = vmatpush1.xpose.msra.mxu0 0.0
      %192 = vmatprep.subr.mxu0 0.0
      %193 = vmatpush1.xpose.msra.mxu0 0.0
      %194 = vmatprep.subr.mxu0 0.0
      %195 = vmatpush1.xpose.msra.mxu0 0.0
      %196 = vmatprep.subr.mxu0 0.0
      %197 = vmatpush1.xpose.msra.mxu0 0.0
      %198 = vmatprep.subr.mxu0 0.0
      %199 = vmatpush1.xpose.msra.mxu0 0.0
      %200 = vmatprep.subr.mxu0 0.0
      %201 = vmatpush1.xpose.msra.mxu0 0.0
      %202 = vmatprep.subr.mxu0 0.0
      %203 = vmatpush1.xpose.msra.mxu0 0.0
      %204 = vmatprep.subr.mxu0 0.0
      %205 = vmatpush1.xpose.msra.mxu0 0.0
      %206 = vmatprep.subr.mxu0 0.0
      %207 = vmatpush1.xpose.msra.mxu0 0.0
      %208 = vmatprep.subr.mxu0 0.0
      %209 = vmatpush1.xpose.msra.mxu0 0.0
      %210 = vmatprep.subr.mxu0 0.0
      %211 = vmatpush1.xpose.msra.mxu0 0.0
      %212 = vmatprep.subr.mxu0 0.0
      %213 = vmatpush1.xpose.msra.mxu0 0.0
      %214 = vmatprep.subr.mxu0 0.0
      %215 = vmatpush1.xpose.msra.mxu0 0.0
      %216 = vmatprep.subr.mxu0 0.0
      %217 = vmatpush1.xpose.msra.mxu0 0.0
      %218 = vmatprep.subr.mxu0 0.0
      %219 = vmatpush1.xpose.msra.mxu0 0.0
      %220 = vmatprep.subr.mxu0 0.0
      %221 = vmatpush1.xpose.msra.mxu0 0.0
      %222 = vmatprep.subr.mxu0 0.0
      %223 = vmatpush1.xpose.msra.mxu0 0.0
      %224 = vmatprep.subr.mxu0 0.0
      %225 = vmatpush1.xpose.msra.mxu0 0.0
      %226 = vmatprep.subr.mxu0 0.0
      %227 = vmatpush1.xpose.msra.mxu0 0.0
      %228 = vmatprep.subr.mxu0 0.0
      %229 = vmatpush1.xpose.msra.mxu0 0.0
      %230 = vmatprep.subr.mxu0 0.0
      %231 = vmatpush1.xpose.msra.mxu0 0.0
      %232 = vmatprep.subr.mxu0 0.0
      %233 = vmatpush1.xpose.msra.mxu0 0.0
      %234 = vmatprep.subr.mxu0 0.0
      %235 = vmatpush1.xpose.msra.mxu0 0.0
      %236 = vmatprep.subr.mxu0 0.0
      %237 = vmatpush1.xpose.msra.mxu0 0.0
      %238 = vmatprep.subr.mxu0 0.0
      %239 = vmatpush1.xpose.msra.mxu0 0.0
      %240 = vmatprep.subr.mxu0 0.0
      %241 = vmatpush1.xpose.msra.mxu0 0.0
      %242 = vmatprep.subr.mxu0 0.0
      %243 = vmatpush1.xpose.msra.mxu0 0.0
      %244 = vmatprep.mubr.f32.mxu0 0.0
      %245 = vmatmul.mubr.f32.gmra.mrb[0].mxu0 %v166
      %v246 = vpop.f32.mrb[0].mxu0
      %v247 = vadd.f32 %v162, %v246
      %v248 = vpop.f32.mrb[0].mxu0
      %249 = vdwg.mxu0
      %v250 = vmul.f32 %v247, %v247
      %v251 = vsel %vm143, %v250, 0.0
      %252 = vadd.xlane.f32.xlu0 %v251
      %v253 = vpop.xlane.xlu0 %252
      %v254 = vmax.f32 %v253, 1e-24
      %v255 = vrsqrt.pop %v254
      %v256 = vmul.f32 %v247, %v255
      %257 = vst.msk [vmem:[#allocation8] sm:$0x3] %vm143, %v256
    $region25: #{tpu_custom_call.1} parent=1 // pred_fallthru
      _
    // Predicated region
    $region26: #{tpu_custom_call.1} parent=1 // pred_check
      _
    $region27: #{tpu_custom_call.1} parent=1 // pred_check_branch
      %259 = sbr.rel (0) target = $region29
    $region28: #{tpu_custom_call.1} parent=1 // pred_region
      %s261 = ssub.s32 32, 32
      %262 = vsyncadd [#allocation7], %s261
      %s264 = sshll.u32 [#allocation8], 4
      %s265 = int_to_ptr.vmem [resolvable:$true] %s264
      %267 = dma.vmem_to_hbm [thread:$0]  %s265, 32, %s3, [#allocation7]
    $region29: #{tpu_custom_call.1} parent=1 // pred_fallthru
      _
    // Predicated region
    $region30: #{tpu_custom_call.1} parent=1 // pred_check
      _
    $region31: #{tpu_custom_call.1} parent=1 // pred_check_branch
      %269 = sbr.rel (0) target = $region33
    $region32: #{tpu_custom_call.1} parent=1 // pred_region
      %270 = dma.done [#allocation7], 32
    $region33: #{tpu_custom_call.1} parent=1 // pred_fallthru
      _
    %271 = vsyncpa [#allocation6], 1
    %272 = vsyncpa [#allocation7], 1
  %273 = vsyncmov [#allocation4]
  %s274 = vpop.sfrf %273
  %p275 = scmp.eq.s32.totalorder %s274, 0
  %p276 = pneg %p275
  %278 = shalt.err (%p276)

</llo_original>
